<compile_context>
chip_gen: v7x
topology: tpu7x:2x2x1
jax: 0.10.0
libtpu: 0.0.40
codegen_flags: <defaults>
</compile_context>

<pallas_src>
import functools

import jax
import jax.numpy as jnp
import numpy as np
from jax.experimental import pallas as pl
from jax.experimental.pallas import tpu as pltpu

_LOG2E = 1.4426950408889634      # log2(e)
_PAD_NEG = -1e9                   # exp(_PAD_NEG) == 0 in f32 -> padded rows don't pollute the sum
_MAX_TILE_B = 512


def _round_up(x: int, m: int) -> int:
    return (x + m - 1) // m * m


def _choose_tile_b(batch: int, n_classes: int, itemsize: int,
                   vmem_budget: int = 12 * 1024 * 1024) -> int:
    """Largest multiple-of-8 row tile whose double-buffered block fits the budget."""
    max_rows = max(8, vmem_budget // max(1, 2 * n_classes * itemsize))
    tile = min(_MAX_TILE_B, _round_up(batch, 8), (max_rows // 8) * 8)
    return max(8, tile)


def _make_ce_kernel(weight: float, reduction: str, n_valid_rows: int, tile_b: int):
    inv_n = 1.0 / float(n_valid_rows)

    def ce_kernel(x_ref, t_ref, out_ref, esum_ref, g_ref):
        i = pl.program_id(0)
        n_tiles = pl.num_programs(0)

        @pl.when(i == 0)
        def _init():
            esum_ref[...] = jnp.zeros_like(esum_ref)

        x = x_ref[...].astype(jnp.float32)          # (tile_b, C) — upcast in-kernel
        t = t_ref[...]                              # (tile_b, 1) int32 targets
        tb, n_classes = x.shape

        # Gather x[b, t[b]] via one-hot lane mask (VPU compare + per-row lane reduce).
        lane_ids = jax.lax.broadcasted_iota(jnp.int32, (tb, n_classes), 1)
        gathered = jnp.sum(jnp.where(lane_ids == t, x, 0.0), axis=1, keepdims=True)

        # Stash per-row gathered logits; finalized once the global exp-sum is known.
        row0 = pl.multiple_of(i * tile_b, 8)
        g_ref[pl.ds(row0, tile_b), :] = gathered

        # Lane-resident partial of the GLOBAL exp-sum (sublane reduce only per tile).
        esum_ref[...] += jnp.sum(jnp.exp(x), axis=0, keepdims=True)

        @pl.when(i == n_tiles - 1)
        def _finalize():
            s = jnp.sum(esum_ref[...])              # single cross-lane reduce, once
            log2_s = jnp.log2(s)
            g = g_ref[...]                          # (B_pad, 1)
            # log2(exp(g) / S) == g * log2(e) - log2(S): one transcendental total.
            logs = jnp.maximum(g * _LOG2E - log2_s, -100.0)
            row_ids = jax.lax.broadcasted_iota(jnp.int32, g.shape, 0)
            valid = row_ids < n_valid_rows
            total = jnp.sum(jnp.where(valid, -weight * logs, 0.0))
            if reduction == "mean":
                out_ref[0, 0] = total * inv_n       # mean = sum * (1/B)
            else:  # "sum"
                out_ref[0, 0] = total

    return ce_kernel


@functools.partial(jax.jit, static_argnames=("weight", "reduction"))
def custom_cross_entropy_loss(inputs, targets, weight=1.0, reduction="mean"):
    """Pallas implementation of CustomCrossEntropyLoss.forward (scalar weight)."""
    if reduction not in ("mean", "sum"):
        raise ValueError(f"unsupported reduction: {reduction}")
    if isinstance(weight, (list, tuple)):
        # TODO(synk): list-valued per-class weight is not implemented (scalar only).
        raise NotImplementedError("only scalar float weight is supported")

    batch = inputs.shape[0]
    x = inputs.reshape(batch, -1)                   # keep HBM dtype (bf16 stays bf16)
    n_classes = x.shape[1]
    t = targets.reshape(batch).astype(jnp.int32)

    itemsize = jnp.dtype(x.dtype).itemsize
    tile_b = _choose_tile_b(batch, n_classes, itemsize)
    b_pad = _round_up(max(batch, tile_b), tile_b)
    if b_pad != batch:
        x = jnp.pad(x, ((0, b_pad - batch), (0, 0)), constant_values=_PAD_NEG)
        t = jnp.pad(t, (0, b_pad - batch))
    t = t.reshape(b_pad, 1)
    num_tiles = b_pad // tile_b

    # Explicit VMEM budget: double-buffered inputs + scratch + f32 temporaries headroom.
    c_pad = _round_up(n_classes, 128)
    vmem_bytes = (2 * tile_b * n_classes * itemsize     # double-buffered logits tile
                  + 2 * tile_b * 128 * 4                # targets tile (lane-padded)
                  + 8 * c_pad * 4                       # (1, C) exp-sum partial
                  + b_pad * 128 * 4                     # gathered-logit scratch
                  + 4 * tile_b * c_pad * 4)             # f32 temporaries headroom
    vmem_limit = int(min(max(vmem_bytes, 16 * 1024 * 1024), 48 * 1024 * 1024))

    kernel = _make_ce_kernel(float(weight), reduction, batch, tile_b)

    out = pl.pallas_call(
        kernel,
        out_shape=jax.ShapeDtypeStruct((1, 1), jnp.float32),
        grid_spec=pltpu.PrefetchScalarGridSpec(
            num_scalar_prefetch=0,
            grid=(num_tiles,),
            in_specs=[
                pl.BlockSpec((tile_b, n_classes), lambda i: (i, 0)),   # logits tile
                pl.BlockSpec((tile_b, 1), lambda i: (i, 0)),           # targets tile
            ],
            out_specs=pl.BlockSpec(memory_space=pltpu.SMEM),           # scalar result
            scratch_shapes=[
                pltpu.VMEM((1, n_classes), jnp.float32),   # lane-resident exp-sum partial
                pltpu.VMEM((b_pad, 1), jnp.float32),       # gathered target logits
            ],
        ),
        compiler_params=pltpu.CompilerParams(
            dimension_semantics=("arbitrary",),            # batch axis carries accumulator
            vmem_limit_bytes=vmem_limit,
        ),
    )(x, t)
    return out[0, 0]


def _reference_loss(inputs, targets, weight=1.0, reduction="mean"):
    """Pure-JAX reference mirroring the PyTorch code line-by-line."""
    x = inputs.reshape(inputs.shape[0], -1).astype(jnp.float32)
    gathered = jnp.take_along_axis(x, targets.reshape(-1, 1).astype(jnp.int32), axis=1)
    exps = jnp.exp(gathered)
    expinputs = jnp.exp(x).sum()
    logs = jnp.maximum(jnp.log2(exps / expinputs), -100.0)
    loss = -weight * logs
    return loss.mean() if reduction == "mean" else loss.sum()


if __name__ == "__main__":
    # Small deterministic example: batch=2, channels=4, 16x16 spatial (flattened C=1024).
    key = jax.random.PRNGKey(0)
    k_x, k_t = jax.random.split(key)
    B, C, H, W = 2, 4, 16, 16
    inputs = jax.random.normal(k_x, (B, C, H, W), dtype=jnp.float32)
    n_flat = C * H * W
    targets = jax.random.randint(k_t, (B,), 0, n_flat, dtype=jnp.int32)

    weight = 1.0
    reduction = "mean"

    loss = custom_cross_entropy_loss(inputs, targets, weight=weight, reduction=reduction)
    loss = jax.block_until_ready(loss)

    ref = jax.block_until_ready(_reference_loss(inputs, targets, weight, reduction))
    np.testing.assert_allclose(np.asarray(loss), np.asarray(ref), rtol=1e-5, atol=1e-5)

    print("KERNEL_OK")
</pallas_src>

<mosaic_0001>
module attributes {stable_mosaic.version = 11 : i64} {
  func.func @ce_kernel(%arg0: i32, %arg1: memref<8x1024xf32, #tpu.memory_space<vmem>>, %arg2: memref<8x1xi32, #tpu.memory_space<vmem>>, %arg3: memref<1x1xf32, #tpu.memory_space<smem>>, %arg4: memref<1x1024xf32, #tpu.memory_space<vmem>>, %arg5: memref<8x1xf32, #tpu.memory_space<vmem>>) attributes {dimension_semantics = [#tpu.dimension_semantics<arbitrary>], iteration_bounds = array<i64: 1>, scalar_prefetch = 0 : i64, scratch_operands = 2 : i64, tpu.core_type = #tpu.core_type<tc>, window_params = [{transform_indices = @transform_0, window_bounds = array<i64: 8, 1024>}, {transform_indices = @transform_1, window_bounds = array<i64: 8, 1>}, {transform_indices = @transform_2, window_bounds = array<i64: 1, 1>}]} {
    %c0_i32 = arith.constant 0 : i32
    %0 = arith.cmpi eq, %arg0, %c0_i32 : i32
    %1 = arith.extui %0 : i1 to i32
    %c0_i32_0 = arith.constant 0 : i32
    %2 = arith.cmpi ne, %1, %c0_i32_0 : i32
    scf.if %2 {
      %cst_13 = arith.constant 0.000000e+00 : f32
      %25 = vector.broadcast %cst_13 : f32 to vector<1x1024xf32>
      %c0_14 = arith.constant 0 : index
      %c0_15 = arith.constant 0 : index
      %26 = vector.load %arg4[%c0_14, %c0_15] : memref<1x1024xf32, #tpu.memory_space<vmem>>, vector<1x1024xf32>
      tpu.vector_store %arg4[%c0_14, %c0_15], %25 {strides = array<i32>} : memref<1x1024xf32, #tpu.memory_space<vmem>>, vector<1x1024xf32>,
    } else {
    }
    %c0 = arith.constant 0 : index
    %c0_1 = arith.constant 0 : index
    %3 = vector.load %arg1[%c0, %c0_1] : memref<8x1024xf32, #tpu.memory_space<vmem>>, vector<8x1024xf32>
    %c0_2 = arith.constant 0 : index
    %c0_3 = arith.constant 0 : index
    %4 = vector.load %arg2[%c0_2, %c0_3] : memref<8x1xi32, #tpu.memory_space<vmem>>, vector<8x1xi32>
    %5 = tpu.iota {dimensions = array<i32: 1>} : vector<8x1024xi32>
    %6 = vector.broadcast %4 : vector<8x1xi32> to vector<8x1024xi32>
    %7 = arith.cmpi eq, %5, %6 : vector<8x1024xi32>
    %cst = arith.constant 0.000000e+00 : f32
    %8 = vector.broadcast %cst : f32 to vector<8x1024xf32>
    %9 = arith.select %7, %3, %8 : vector<8x1024xi1>, vector<8x1024xf32>
    %cst_4 = arith.constant dense<0.000000e+00> : vector<8xf32>
    %10 = vector.multi_reduction <add>, %9, %cst_4 [1] : vector<8x1024xf32> to vector<8xf32>
    %11 = vector.shape_cast %10 : vector<8xf32> to vector<8x1xf32>
    %c8_i32 = arith.constant 8 : i32
    %12 = arith.muli %arg0, %c8_i32 : i32
    %13 = tpu.assume_multiple %12, 8 : i32
    %14 = arith.index_cast %13 : i32 to index
    %c0_5 = arith.constant 0 : index
    %15 = vector.load %arg5[%14, %c0_5] : memref<8x1xf32, #tpu.memory_space<vmem>>, vector<8x1xf32>
    tpu.vector_store %arg5[%14, %c0_5], %11 {strides = array<i32>} : memref<8x1xf32, #tpu.memory_space<vmem>>, vector<8x1xf32>,
    %c0_6 = arith.constant 0 : index
    %c0_7 = arith.constant 0 : index
    %16 = vector.load %arg4[%c0_6, %c0_7] : memref<1x1024xf32, #tpu.memory_space<vmem>>, vector<1x1024xf32>
    %17 = math.exp %3 : vector<8x1024xf32>
    %cst_8 = arith.constant dense<0.000000e+00> : vector<1024xf32>
    %18 = vector.multi_reduction <add>, %17, %cst_8 [0] : vector<8x1024xf32> to vector<1024xf32>
    %19 = vector.shape_cast %18 : vector<1024xf32> to vector<1x1024xf32>
    %20 = arith.addf %16, %19 : vector<1x1024xf32>
    %c0_9 = arith.constant 0 : index
    %c0_10 = arith.constant 0 : index
    %21 = vector.load %arg4[%c0_9, %c0_10] : memref<1x1024xf32, #tpu.memory_space<vmem>>, vector<1x1024xf32>
    tpu.vector_store %arg4[%c0_9, %c0_10], %20 {strides = array<i32>} : memref<1x1024xf32, #tpu.memory_space<vmem>>, vector<1x1024xf32>,
    %c0_i32_11 = arith.constant 0 : i32
    %22 = arith.cmpi eq, %arg0, %c0_i32_11 : i32
    %23 = arith.extui %22 : i1 to i32
    %c0_i32_12 = arith.constant 0 : i32
    %24 = arith.cmpi ne, %23, %c0_i32_12 : i32
    scf.if %24 {
      %c0_13 = arith.constant 0 : index
      %c0_14 = arith.constant 0 : index
      %25 = vector.load %arg4[%c0_13, %c0_14] : memref<1x1024xf32, #tpu.memory_space<vmem>>, vector<1x1024xf32>
      %26 = vector.shape_cast %25 : vector<1x1024xf32> to vector<1x1x1024xf32>
      %cst_15 = arith.constant dense<0.000000e+00> : vector<1xf32>
      %27 = vector.multi_reduction <add>, %26, %cst_15 [1, 2] : vector<1x1x1024xf32> to vector<1xf32>
      %28 = vector.shape_cast %27 : vector<1xf32> to vector<1x1x1xf32>
      %29 = vector.extract %28[0, 0, 0] : f32 from vector<1x1x1xf32>
      %30 = math.log %29 : f32
      %cst_16 = arith.constant 2.000000e+00 : f32
      %31 = math.log %cst_16 : f32
      %32 = arith.divf %30, %31 : f32
      %c0_17 = arith.constant 0 : index
      %c0_18 = arith.constant 0 : index
      %33 = vector.load %arg5[%c0_17, %c0_18] : memref<8x1xf32, #tpu.memory_space<vmem>>, vector<8x1xf32>
      %cst_19 = arith.constant 1.44269502 : f32
      %34 = vector.broadcast %cst_19 : f32 to vector<8x1xf32>
      %35 = arith.mulf %33, %34 : vector<8x1xf32>
      %36 = vector.broadcast %32 : f32 to vector<8x1xf32>
      %37 = arith.subf %35, %36 : vector<8x1xf32>
      %cst_20 = arith.constant -1.000000e+02 : f32
      %38 = vector.broadcast %cst_20 : f32 to vector<8x1xf32>
      %39 = arith.maximumf %37, %38 : vector<8x1xf32>
      %40 = tpu.iota {dimensions = array<i32: 0>} : vector<8x1xi32>
      %c2_i32 = arith.constant 2 : i32
      %41 = vector.broadcast %c2_i32 : i32 to vector<8x1xi32>
      %42 = arith.cmpi slt, %40, %41 : vector<8x1xi32>
      %cst_21 = arith.constant -1.000000e+00 : f32
      %43 = vector.broadcast %cst_21 : f32 to vector<8x1xf32>
      %44 = arith.mulf %43, %39 : vector<8x1xf32>
      %cst_22 = arith.constant 0.000000e+00 : f32
      %45 = vector.broadcast %cst_22 : f32 to vector<8x1xf32>
      %46 = arith.select %42, %44, %45 : vector<8x1xi1>, vector<8x1xf32>
      %47 = vector.shape_cast %46 : vector<8x1xf32> to vector<1x8x1xf32>
      %cst_23 = arith.constant dense<0.000000e+00> : vector<1xf32>
      %48 = vector.multi_reduction <add>, %47, %cst_23 [1, 2] : vector<1x8x1xf32> to vector<1xf32>
      %49 = vector.shape_cast %48 : vector<1xf32> to vector<1x1x1xf32>
      %50 = vector.extract %49[0, 0, 0] : f32 from vector<1x1x1xf32>
      %cst_24 = arith.constant 5.000000e-01 : f32
      %51 = arith.mulf %50, %cst_24 : f32
      %c0_25 = arith.constant 0 : index
      %c0_26 = arith.constant 0 : index
      %52 = memref.load %arg3[%c0_25, %c0_26] : memref<1x1xf32, #tpu.memory_space<smem>>
      memref.store %51, %arg3[%c0_25, %c0_26] : memref<1x1xf32, #tpu.memory_space<smem>>
    } else {
    }
    return
  }
  func.func @transform_0(%arg0: i32) -> (i32, i32) {
    %c0_i32 = arith.constant 0 : i32
    %c0_i32_0 = arith.constant 0 : i32
    return %arg0, %c0_i32 : i32, i32
  }
  func.func @transform_1(%arg0: i32) -> (i32, i32) {
    %c0_i32 = arith.constant 0 : i32
    %c0_i32_0 = arith.constant 0 : i32
    return %arg0, %c0_i32 : i32, i32
  }
  func.func @transform_2(%arg0: i32) -> (i32, i32) {
    %c0_i32 = arith.constant 0 : i32
    %c0_i32_0 = arith.constant 0 : i32
    %c0_i32_1 = arith.constant 0 : i32
    return %c0_i32, %c0_i32_0 : i32, i32
  }
}

</mosaic_0001>

<llo_original>
// kernel: custom_cross_entropy_loss.1
$region0: #{custom_cross_entropy_loss.1}
  #allocation0 [shape = 'u32[]', space=smem, size = 0x4, offset = 0x4, fixed_abs, tag = 'smem constant byte address 0x4 - core index']
  #allocation1 [shape = 'u32[144,128]{1,0:T(1,128)}', space=vmem, size = 0x12000, scoped, tag = 'internal scratch']
  #allocation2 [shape = 'f32[1,1024]{1,0:T(1,128)}', space=vmem, size = 0x1000, scoped, tag = 'scratch operand']
  #allocation3 [shape = 'f32[8,1]{1,0:T(8,128)}', space=vmem, size = 0x1000, scoped, tag = 'scratch operand']
  %s0 = inlined_call_operand.vmem [shape: f32[8,1024], index: 0, kind: input, shape index: {}]
  %s1 = inlined_call_operand.vmem [shape: s32[8,1], index: 1, kind: input, shape index: {}]
  %s2 = inlined_call_operand.hbm [shape: f32[1,1], index: 2, kind: output, shape index: {}]
  %s3 = sld [smem:[#allocation0]]
  $region26: #{custom_cross_entropy_loss.1} parent=0
    _
  %s5 = ssub.s32 1, %s3
  %s6 = scalar_select 0, %s5, %s3
  $region1: #{custom_cross_entropy_loss.1} parent=0
    #allocation4 [shape = 'u8[512]{0}', space=smem, size = 0x200, scoped, tag = 'output window, operand 0, single buffered']
    #allocation5 [shape = 's32[1]{0}', space=sflag, size = 0x4, scoped, tag = 'scoped memory for custom_cross_entropy_loss.1']
    %7 = vsyncpa [#allocation5], 0
    // Predicated region
    $region2: #{custom_cross_entropy_loss.1} parent=1 // pred_check
      _
    $region3: #{custom_cross_entropy_loss.1} parent=1 // pred_check_branch
      %9 = sbr.rel (0) target = $region5
    $region4: #{custom_cross_entropy_loss.1} parent=1 // pred_region
      _
    $region5: #{custom_cross_entropy_loss.1} parent=1 // pred_fallthru
      _
    // Predicated region
    $region6: #{custom_cross_entropy_loss.1} parent=1 // pred_check
      _
    $region7: #{custom_cross_entropy_loss.1} parent=1 // pred_check_branch
      %11 = sbr.rel (0) target = $region9
    $region8: #{custom_cross_entropy_loss.1} parent=1 // pred_region
      _
    $region9: #{custom_cross_entropy_loss.1} parent=1 // pred_fallthru
      _
    %p12 = scmp.eq.s32.totalorder 0, 0
    // Predicated region
    $region10: #{custom_cross_entropy_loss.1} parent=1 // pred_check
      %p13 = pneg %p12
    $region11: #{custom_cross_entropy_loss.1} parent=1 // pred_check_branch
      %15 = sbr.rel (%p13) target = $region13
    $region12: #{custom_cross_entropy_loss.1} parent=1 // pred_region
      %16 = vst [vmem:[#allocation2] sm:$0xff] 0.0
    $region13: #{custom_cross_entropy_loss.1} parent=1 // pred_fallthru
      _
    %v17 = vld [vmem:[%s0] sm:$0xff]
    %v18 = vld [vmem:[%s0 + $0x8] sm:$0xff]
    %v19 = vld [vmem:[%s0 + $0x10] sm:$0xff]
    %v20 = vld [vmem:[%s0 + $0x18] sm:$0xff]
    %v21 = vld [vmem:[%s0 + $0x20] sm:$0xff]
    %v22 = vld [vmem:[%s0 + $0x28] sm:$0xff]
    %v23 = vld [vmem:[%s0 + $0x30] sm:$0xff]
    %v24 = vld [vmem:[%s0 + $0x38] sm:$0xff]
    %v25 = vld [vmem:[%s1] sm:$0xff]
    %v26 = vlaneseq
    %v27 = vand.u32 %v26, 127
    %v28 = vadd.s32 %v27, 128
    %v29 = vadd.s32 %v27, 256
    %v30 = vadd.s32 %v27, 384
    %v31 = vadd.s32 %v27, 512
    %v32 = vadd.s32 %v27, 640
    %v33 = vadd.s32 %v27, 768
    %v34 = vadd.s32 %v27, 896
    %35 = vset.pattern.permute.xlu0 0
    %36 = vperm.xlu0 %35, %v25
    %v37 = vpop.permute.xlu0 %36
    %vm38 = vcmp.eq.s32.totalorder %v27, %v37
    %vm39 = vcmp.eq.s32.totalorder %v28, %v37
    %vm40 = vcmp.eq.s32.totalorder %v29, %v37
    %vm41 = vcmp.eq.s32.totalorder %v30, %v37
    %vm42 = vcmp.eq.s32.totalorder %v31, %v37
    %vm43 = vcmp.eq.s32.totalorder %v32, %v37
    %vm44 = vcmp.eq.s32.totalorder %v33, %v37
    %vm45 = vcmp.eq.s32.totalorder %v34, %v37
    %v46 = vsel %vm38, %v17, 0.0
    %v47 = vsel %vm39, %v18, 0.0
    %v48 = vsel %vm40, %v19, 0.0
    %v49 = vsel %vm41, %v20, 0.0
    %v50 = vsel %vm42, %v21, 0.0
    %v51 = vsel %vm43, %v22, 0.0
    %v52 = vsel %vm44, %v23, 0.0
    %v53 = vsel %vm45, %v24, 0.0
    %v54 = vadd.f32 %v46, %v47
    %v55 = vadd.f32 %v54, %v48
    %v56 = vadd.f32 %v55, %v49
    %v57 = vadd.f32 %v56, %v50
    %v58 = vadd.f32 %v57, %v51
    %v59 = vadd.f32 %v58, %v52
    %v60 = vadd.f32 %v59, %v53
    %61 = vadd.xlane.f32.xlu0 %v60
    %v62 = vpop.xlane.xlu0 %61
    %s63 = smul.u32 0, 8
    %s64 = scalar_lea.vmem [#allocation3], %s63
    %vm65 = vcmask 7168
    %66 = vst.msk [vmem:[%s64] sm:$0xff] %vm65, %v62
    %v67 = vld [vmem:[#allocation2] sm:$0xff]
    %v68 = vmul.f32 %v17, 1.442695
    %v69 = vpow.pop %v68
    %v70 = vmul.f32 %v18, 1.442695
    %v71 = vpow.pop %v70
    %v72 = vmul.f32 %v19, 1.442695
    %v73 = vpow.pop %v72
    %v74 = vmul.f32 %v20, 1.442695
    %v75 = vpow.pop %v74
    %v76 = vmul.f32 %v21, 1.442695
    %v77 = vpow.pop %v76
    %v78 = vmul.f32 %v22, 1.442695
    %v79 = vpow.pop %v78
    %v80 = vmul.f32 %v23, 1.442695
    %v81 = vpow.pop %v80
    %v82 = vmul.f32 %v24, 1.442695
    %v83 = vpow.pop %v82
    %v84 = vrot.slane %v69, 4
    %v85 = vadd.f32 %v69, %v84
    %v86 = vrot.slane %v85, 2
    %v87 = vadd.f32 %v85, %v86
    %v88 = vrot.slane %v87, 1
    %v89 = vadd.f32 %v87, %v88
    %v90 = vrot.slane %v71, 4
    %v91 = vadd.f32 %v71, %v90
    %v92 = vrot.slane %v91, 2
    %v93 = vadd.f32 %v91, %v92
    %v94 = vrot.slane %v93, 1
    %v95 = vadd.f32 %v93, %v94
    %v96 = vrot.slane %v73, 4
    %v97 = vadd.f32 %v73, %v96
    %v98 = vrot.slane %v97, 2
    %v99 = vadd.f32 %v97, %v98
    %v100 = vrot.slane %v99, 1
    %v101 = vadd.f32 %v99, %v100
    %v102 = vrot.slane %v75, 4
    %v103 = vadd.f32 %v75, %v102
    %v104 = vrot.slane %v103, 2
    %v105 = vadd.f32 %v103, %v104
    %v106 = vrot.slane %v105, 1
    %v107 = vadd.f32 %v105, %v106
    %v108 = vrot.slane %v77, 4
    %v109 = vadd.f32 %v77, %v108
    %v110 = vrot.slane %v109, 2
    %v111 = vadd.f32 %v109, %v110
    %v112 = vrot.slane %v111, 1
    %v113 = vadd.f32 %v111, %v112
    %v114 = vrot.slane %v79, 4
    %v115 = vadd.f32 %v79, %v114
    %v116 = vrot.slane %v115, 2
    %v117 = vadd.f32 %v115, %v116
    %v118 = vrot.slane %v117, 1
    %v119 = vadd.f32 %v117, %v118
    %v120 = vrot.slane %v81, 4
    %v121 = vadd.f32 %v81, %v120
    %v122 = vrot.slane %v121, 2
    %v123 = vadd.f32 %v121, %v122
    %v124 = vrot.slane %v123, 1
    %v125 = vadd.f32 %v123, %v124
    %v126 = vrot.slane %v83, 4
    %v127 = vadd.f32 %v83, %v126
    %v128 = vrot.slane %v127, 2
    %v129 = vadd.f32 %v127, %v128
    %v130 = vrot.slane %v129, 1
    %v131 = vadd.f32 %v129, %v130
    %v140 = vcombine.low %v89, %v95
    %v141 = vcombine.low %v101, %v107
    %v142 = vcombine.low %v113, %v119
    %v143 = vcombine.low %v125, %v131
    %v145 = vunpack.c.l.s4 1966171168
    %v146 = vunpack.c.0.s8 %v145
    %v147 = vlaneseq
    %v148 = vshrl.u32 %v147, 7
    %v149 = vsub.s32 %v146, %v148
    %v150 = vrot.slane %v140, %v149
    %v152 = vunpack.c.l.s4 1966171168
    %v153 = vunpack.c.0.s8 %v152
    %v154 = vlaneseq
    %v155 = vshrl.u32 %v154, 7
    %v156 = vsub.s32 %v153, %v155
    %v157 = vrot.slane %v141, %v156
    %v159 = vunpack.c.l.s4 1966171168
    %v160 = vunpack.c.0.s8 %v159
    %v161 = vlaneseq
    %v162 = vshrl.u32 %v161, 7
    %v163 = vsub.s32 %v160, %v162
    %v164 = vrot.slane %v142, %v163
    %v166 = vunpack.c.l.s4 1966171168
    %v167 = vunpack.c.0.s8 %v166
    %v168 = vlaneseq
    %v169 = vshrl.u32 %v168, 7
    %v170 = vsub.s32 %v167, %v169
    %v171 = vrot.slane %v143, %v170
    %v172 = vcombine.low %v150, %v157
    %v173 = vcombine.low %v164, %v171
    %v175 = vunpack.c.l.s4 1966171168
    %v176 = vunpack.c.0.s8 %v175
    %v177 = vlaneseq
    %v178 = vshrl.u32 %v177, 7
    %v179 = vsub.s32 %v176, %v178
    %v180 = vrot.slane %v172, %v179
    %v182 = vunpack.c.l.s4 1966171168
    %v183 = vunpack.c.0.s8 %v182
    %v184 = vlaneseq
    %v185 = vshrl.u32 %v184, 7
    %v186 = vsub.s32 %v183, %v185
    %v187 = vrot.slane %v173, %v186
    %v188 = vcombine.low %v180, %v187
    %v190 = vadd.f32 %v67, %v188
    %191 = vst [vmem:[#allocation2] sm:$0xff] %v190
    // Predicated region
    $region14: #{custom_cross_entropy_loss.1} parent=1 // pred_check
      %p192 = pneg %p12
    $region15: #{custom_cross_entropy_loss.1} parent=1 // pred_check_branch
      %194 = sbr.rel (%p192) target = $region17
    $region16: #{custom_cross_entropy_loss.1} parent=1 // pred_region
      %v195 = vld [vmem:[#allocation2] sm:$0xff]
      %v197 = vlaneseq
      %v198 = vshrl.u32 %v197, 7
      %v199 = vsub.s32 0, %v198
      %v200 = vrot.slane %v195, %v199
      %v201 = vlaneseq
      %v202 = vshrl.u32 %v201, 7
      %v203 = vsub.s32 1, %v202
      %v204 = vrot.slane %v195, %v203
      %v205 = vlaneseq
      %v206 = vshrl.u32 %v205, 7
      %v207 = vsub.s32 2, %v206
      %v208 = vrot.slane %v195, %v207
      %v209 = vlaneseq
      %v210 = vshrl.u32 %v209, 7
      %v211 = vsub.s32 3, %v210
      %v212 = vrot.slane %v195, %v211
      %v213 = vlaneseq
      %v214 = vshrl.u32 %v213, 7
      %v215 = vsub.s32 4, %v214
      %v216 = vrot.slane %v195, %v215
      %v217 = vlaneseq
      %v218 = vshrl.u32 %v217, 7
      %v219 = vsub.s32 5, %v218
      %v220 = vrot.slane %v195, %v219
      %v221 = vlaneseq
      %v222 = vshrl.u32 %v221, 7
      %v223 = vsub.s32 6, %v222
      %v224 = vrot.slane %v195, %v223
      %v225 = vlaneseq
      %v226 = vshrl.u32 %v225, 7
      %v227 = vsub.s32 7, %v226
      %v228 = vrot.slane %v195, %v227
      %vm237 = vcmask 1040384
      %v238 = vsel %vm237, %v200, 0.0
      %v239 = vsel %vm237, %v204, 0.0
      %v240 = vadd.f32 %v238, %v239
      %v241 = vsel %vm237, %v208, 0.0
      %v242 = vadd.f32 %v240, %v241
      %v243 = vsel %vm237, %v212, 0.0
      %v244 = vadd.f32 %v242, %v243
      %v245 = vsel %vm237, %v216, 0.0
      %v246 = vadd.f32 %v244, %v245
      %v247 = vsel %vm237, %v220, 0.0
      %v248 = vadd.f32 %v246, %v247
      %v249 = vsel %vm237, %v224, 0.0
      %v250 = vadd.f32 %v248, %v249
      %v251 = vsel %vm237, %v228, 0.0
      %v252 = vadd.f32 %v250, %v251
      %253 = vadd.xlane.f32.xlu0 %v252
      %v254 = vpop.xlane.xlu0 %253
      %v255 = vrot.slane %v254, 4
      %v256 = vadd.f32 %v254, %v255
      %v257 = vrot.slane %v256, 2
      %v258 = vadd.f32 %v256, %v257
      %v259 = vrot.slane %v258, 1
      %v260 = vadd.f32 %v258, %v259
      %s261 = vtos %v260
      %v262 = vstv %s261
      %v263 = vlog2.pop %v262
      %v264 = vmul.f32 %v263, 0.6931472
      %s265 = vtos %v264
      %v266 = vrcp.pop 0.6931472
      %s267 = vtos %v266
      %s268 = smul.f32 %s265, %s267
      %v269 = vld [vmem:[#allocation3] sm:$0xff]
      %v270 = vmul.f32 %v269, 1.442695
      %v271 = vstv %s268
      %v272 = vsub.f32 %v270, %v271
      %v273 = vmax.f32 %v272, -100.0
      %v274 = vlaneseq
      %v275 = vshrl.u32 %v274, 7
      %vm276 = vcmp.lt.s32.totalorder %v275, 2
      %v277 = vmul.f32 %v273, -1.0
      %v278 = vsel %vm276, %v277, 0.0
      %v279 = vsel %vm65, %v278, 0.0
      %280 = vadd.xlane.f32.xlu0 %v279
      %v281 = vpop.xlane.xlu0 %280
      %v282 = vrot.slane %v281, 4
      %v283 = vadd.f32 %v281, %v282
      %v284 = vrot.slane %v283, 2
      %v285 = vadd.f32 %v283, %v284
      %v286 = vrot.slane %v285, 1
      %v287 = vadd.f32 %v285, %v286
      %s288 = vtos %v287
      %s289 = smul.f32 %s288, 0.5
      %s290 = scalar_lea.smem [#allocation4], 0
      %291 = sst [smem:[%s290]] %s289
    $region17: #{custom_cross_entropy_loss.1} parent=1 // pred_fallthru
      _
    // Predicated region
    $region18: #{custom_cross_entropy_loss.1} parent=1 // pred_check
      _
    $region19: #{custom_cross_entropy_loss.1} parent=1 // pred_check_branch
      %293 = sbr.rel (0) target = $region21
    $region20: #{custom_cross_entropy_loss.1} parent=1 // pred_region
      %s295 = ssub.s32 16, 16
      %296 = vsyncadd [#allocation5], %s295
      %299 = dma.smem_to_hbm [#allocation4], 16, %s2, [#allocation5]
    $region21: #{custom_cross_entropy_loss.1} parent=1 // pred_fallthru
      _
    // Predicated region
    $region22: #{custom_cross_entropy_loss.1} parent=1 // pred_check
      _
    $region23: #{custom_cross_entropy_loss.1} parent=1 // pred_check_branch
      %301 = sbr.rel (0) target = $region25
    $region24: #{custom_cross_entropy_loss.1} parent=1 // pred_region
      %302 = dma.done [#allocation5], 16
    $region25: #{custom_cross_entropy_loss.1} parent=1 // pred_fallthru
      _
    %303 = sfence
    %304 = vsyncpa [#allocation5], 1

</llo_original>
